<compile_context>
chip_gen: v7x
topology: tpu7x:2x2x1
jax: 0.10.0
libtpu: 0.0.40
codegen_flags: <defaults>
</compile_context>

<pallas_src>
import functools

import jax
import jax.numpy as jnp
from jax.experimental import pallas as pl
from jax.experimental.pallas import tpu as pltpu


def _round_up(x: int, m: int) -> int:
    return (x + m - 1) // m * m


def _cdiv(a: int, b: int) -> int:
    return (a + b - 1) // b


# ---------------------------------------------------------------------------
# Kernels
# ---------------------------------------------------------------------------
def _linear_kernel_single(x_ref, wt_ref, b_ref, o_ref):
    # Single K tile: one MXU pass, bias add, cast, store.  No scratch, no branches.
    acc = jnp.dot(x_ref[...], wt_ref[...], preferred_element_type=jnp.float32)
    o_ref[...] = (acc + b_ref[...].astype(jnp.float32)).astype(o_ref.dtype)


def _linear_kernel_multi_f32out(x_ref, wt_ref, b_ref, o_ref):
    # K-tiled, f32 output: accumulate directly into the VMEM-resident output
    # block (same block index for all k), initialized with the bias at k == 0.
    k = pl.program_id(2)

    @pl.when(k == 0)
    def _():
        o_ref[...] = jnp.broadcast_to(b_ref[...], o_ref.shape).astype(o_ref.dtype)

    o_ref[...] += jnp.dot(x_ref[...], wt_ref[...], preferred_element_type=jnp.float32)


def _linear_kernel_multi_acc(x_ref, wt_ref, b_ref, o_ref, acc_ref):
    # K-tiled, non-f32 output: f32 scratch accumulator + bias/cast finalize.
    k = pl.program_id(2)

    @pl.when(k == 0)
    def _():
        acc_ref[...] = jnp.zeros_like(acc_ref)

    acc_ref[...] += jnp.dot(x_ref[...], wt_ref[...], preferred_element_type=jnp.float32)

    @pl.when(k == pl.num_programs(2) - 1)
    def _():
        o_ref[...] = (acc_ref[...] + b_ref[...].astype(jnp.float32)).astype(o_ref.dtype)


# ---------------------------------------------------------------------------
# Forward (jitted; wT / b_p are prepared once outside this path)
# ---------------------------------------------------------------------------
def _linear_forward(x, wT, b_p, *, D_out, tk, nk, tn, tm_max, compute_dtype,
                    vmem_limit_bytes):
    B, D_in = x.shape
    K_pad, N_pad = wT.shape
    out_dtype = x.dtype

    # --- M tiling (shapes are static under jit) ---------------------------
    if B <= tm_max:
        tm, M_pad = B, B                      # full-dim block, no row padding
    else:
        tm = tm_max
        M_pad = _round_up(B, tm)
    grid_m = M_pad // tm

    # v7x: guarantee >= 2 blocks along a "parallel" axis when possible so the
    # grid can shard across both TensorCores; tn=128 is still lane-dense.
    tn_eff = tn
    if grid_m == 1 and N_pad // tn_eff == 1 and N_pad >= 256:
        tn_eff = 128
    grid_n = N_pad // tn_eff

    # --- prepare x: cast to compute dtype, zero-pad only where required ---
    xp = x.astype(compute_dtype)
    if (M_pad, K_pad) != (B, D_in):
        # K padding is mandatory for correctness (zeros accumulate to zero);
        # M padding only adds rows that are sliced off below.
        xp = jnp.zeros((M_pad, K_pad), compute_dtype).at[:B, :D_in].set(xp)

    c_item = jnp.dtype(compute_dtype).itemsize
    o_item = jnp.dtype(out_dtype).itemsize
    cost = pl.CostEstimate(
        flops=2 * M_pad * N_pad * K_pad,
        transcendentals=0,
        bytes_accessed=(M_pad * K_pad * grid_n + K_pad * N_pad * grid_m) * c_item
        + M_pad * N_pad * o_item + N_pad * 4,
    )

    if nk == 1:
        grid = (grid_m, grid_n)
        in_specs = [
            pl.BlockSpec((tm, tk), lambda i, j: (i, 0)),        # x tile
            pl.BlockSpec((tk, tn_eff), lambda i, j: (0, j)),    # W^T tile
            pl.BlockSpec((1, tn_eff), lambda i, j: (0, j)),     # bias tile
        ]
        out_specs = pl.BlockSpec((tm, tn_eff), lambda i, j: (i, j))
        kernel = _linear_kernel_single
        scratch = []
        dims = ("parallel", "parallel")
    else:
        grid = (grid_m, grid_n, nk)
        in_specs = [
            pl.BlockSpec((tm, tk), lambda i, j, k: (i, k)),
            pl.BlockSpec((tk, tn_eff), lambda i, j, k: (k, j)),
            pl.BlockSpec((1, tn_eff), lambda i, j, k: (0, j)),
        ]
        out_specs = pl.BlockSpec((tm, tn_eff), lambda i, j, k: (i, j))
        dims = ("parallel", "parallel", "arbitrary")
        if out_dtype == jnp.float32:
            kernel = _linear_kernel_multi_f32out
            scratch = []
        else:
            kernel = _linear_kernel_multi_acc
            scratch = [pltpu.VMEM((tm, tn_eff), jnp.float32)]

    out_padded = pl.pallas_call(
        kernel,
        out_shape=jax.ShapeDtypeStruct((M_pad, N_pad), out_dtype),
        grid_spec=pltpu.PrefetchScalarGridSpec(
            num_scalar_prefetch=0,
            grid=grid,
            in_specs=in_specs,
            out_specs=out_specs,
            scratch_shapes=scratch,
        ),
        compiler_params=pltpu.CompilerParams(
            dimension_semantics=dims,
            vmem_limit_bytes=vmem_limit_bytes,  # <= 48 MiB: safe on v7x's 64 MiB
        ),
        cost_estimate=cost,
    )(xp, wT, b_p)

    return out_padded[:B, :D_out]


# ---------------------------------------------------------------------------
# Module-equivalent wrapper: prep params once, jit the forward
# ---------------------------------------------------------------------------
class PallasLinear:
    """Pallas equivalent of torch.nn.Linear: y = x @ W^T + b."""

    def __init__(self, weight, bias, *, compute_dtype=jnp.float32,
                 tm=512, tn=512, tk=1024, vmem_limit_bytes=48 * 1024 * 1024):
        D_out, D_in = weight.shape
        self.D_out, self.D_in = D_out, D_in

        # --- K tiling: never over-pad ----------------------------------
        if D_in <= tk:
            tk_eff, K_pad, nk = D_in, D_in, 1    # full-dim K block, no padding
        else:
            K128 = _round_up(D_in, 128)
            nk = _cdiv(K128, tk)
            tk_eff = _cdiv(K128 // 128, nk) * 128
            K_pad = nk * tk_eff                  # minimal (< tk) over-pad

        # --- N tiling: lane-dense (128-multiple) output -----------------
        N128 = _round_up(D_out, 128)
        n_n = _cdiv(N128, tn)
        tn_eff = _cdiv(N128 // 128, n_n) * 128
        N_pad = n_n * tn_eff

        # One-time layout plumbing (outside the per-call jit path):
        # W (D_out, D_in) -> W^T (K_pad, N_pad), MXU-native (K, N) orientation,
        # zero-padded, cast to the compute dtype (e.g. bf16).
        wT = jnp.zeros((K_pad, N_pad), compute_dtype)
        wT = wT.at[:D_in, :D_out].set(weight.T.astype(compute_dtype))
        b_p = jnp.zeros((1, N_pad), jnp.float32)
        b_p = b_p.at[0, :D_out].set(bias.astype(jnp.float32))
        self.wT = jax.block_until_ready(wT)
        self.b_p = jax.block_until_ready(b_p)

        self._fwd = jax.jit(functools.partial(
            _linear_forward,
            D_out=D_out, tk=tk_eff, nk=nk, tn=tn_eff, tm_max=tm,
            compute_dtype=compute_dtype, vmem_limit_bytes=vmem_limit_bytes))

    def __call__(self, x):
        return self._fwd(x, self.wT, self.b_p)


if __name__ == "__main__":
    # Shapes consistent with the module: batch=8, input_dim=32, output_dim=2.
    batch, input_dim, output_dim = 8, 32, 2

    key = jax.random.PRNGKey(0)
    kx, kw, kb = jax.random.split(key, 3)
    # Mimic PyTorch's U(-1/sqrt(in), 1/sqrt(in)) init.
    bound = 1.0 / jnp.sqrt(jnp.float32(input_dim))
    weight = jax.random.uniform(kw, (output_dim, input_dim), jnp.float32, -bound, bound)
    bias = jax.random.uniform(kb, (output_dim,), jnp.float32, -bound, bound)
    x = jax.random.normal(kx, (batch, input_dim), jnp.float32)

    lin = PallasLinear(weight, bias)
    out = jax.block_until_ready(lin(x))
    ref = jnp.matmul(x, weight.T, precision=jax.lax.Precision.HIGHEST) + bias
    assert out.shape == (batch, output_dim)
    assert jnp.allclose(out, ref, atol=1e-2, rtol=1e-2), float(jnp.max(jnp.abs(out - ref)))

    # Non-aligned, multi-block shape: full-dim K (600, no over-padding),
    # N_pad=256 split into two 128-wide blocks (>=2 parallel blocks for v7x).
    B2, Din2, Dout2 = 200, 600, 130
    k2x, k2w, k2b = jax.random.split(jax.random.PRNGKey(1), 3)
    bound2 = 1.0 / jnp.sqrt(jnp.float32(Din2))
    w2 = jax.random.uniform(k2w, (Dout2, Din2), jnp.float32, -bound2, bound2)
    b2 = jax.random.uniform(k2b, (Dout2,), jnp.float32, -bound2, bound2)
    x2 = jax.random.normal(k2x, (B2, Din2), jnp.float32)

    lin2 = PallasLinear(w2, b2)
    out2 = jax.block_until_ready(lin2(x2))
    ref2 = jnp.matmul(x2, w2.T, precision=jax.lax.Precision.HIGHEST) + b2
    assert out2.shape == (B2, Dout2)
    assert jnp.allclose(out2, ref2, atol=1e-2, rtol=1e-2), float(jnp.max(jnp.abs(out2 - ref2)))

    # bf16 compute path + multi-K-tile path (D_in > tk forces the K-tiled
    # kernel with direct f32-output accumulation).
    B3, Din3, Dout3 = 64, 2304, 256
    k3x, k3w, k3b = jax.random.split(jax.random.PRNGKey(2), 3)
    bound3 = 1.0 / jnp.sqrt(jnp.float32(Din3))
    w3 = jax.random.uniform(k3w, (Dout3, Din3), jnp.float32, -bound3, bound3)
    b3 = jax.random.uniform(k3b, (Dout3,), jnp.float32, -bound3, bound3)
    x3 = jax.random.normal(k3x, (B3, Din3), jnp.float32)

    lin3 = PallasLinear(w3, b3, compute_dtype=jnp.bfloat16, tk=1024)
    out3 = jax.block_until_ready(lin3(x3))
    ref3 = jnp.matmul(x3, w3.T, precision=jax.lax.Precision.HIGHEST) + b3
    assert out3.shape == (B3, Dout3)
    assert jnp.allclose(out3, ref3, atol=6e-2, rtol=6e-2), float(jnp.max(jnp.abs(out3 - ref3)))

    print("KERNEL_OK")
</pallas_src>

<mosaic_0001>
module attributes {stable_mosaic.version = 11 : i64} {
  func.func @_linear_kernel_single(%arg0: i32, %arg1: i32, %arg2: memref<8x32xf32, #tpu.memory_space<vmem>>, %arg3: memref<32x128xf32, #tpu.memory_space<vmem>>, %arg4: memref<1x128xf32, #tpu.memory_space<vmem>>, %arg5: memref<8x128xf32, #tpu.memory_space<vmem>>) attributes {dimension_semantics = [#tpu.dimension_semantics<parallel>, #tpu.dimension_semantics<parallel>], iteration_bounds = array<i64: 1, 1>, scalar_prefetch = 0 : i64, scratch_operands = 0 : i64, tpu.core_type = #tpu.core_type<tc>, window_params = [{transform_indices = @transform_0, window_bounds = array<i64: 8, 32>}, {transform_indices = @transform_1, window_bounds = array<i64: 32, 128>}, {transform_indices = @transform_2, window_bounds = array<i64: 1, 128>}, {transform_indices = @transform_3, window_bounds = array<i64: 8, 128>}]} {
    %c0 = arith.constant 0 : index
    %c0_0 = arith.constant 0 : index
    %0 = vector.load %arg2[%c0, %c0_0] : memref<8x32xf32, #tpu.memory_space<vmem>>, vector<8x32xf32>
    %c0_1 = arith.constant 0 : index
    %c0_2 = arith.constant 0 : index
    %1 = vector.load %arg3[%c0_1, %c0_2] : memref<32x128xf32, #tpu.memory_space<vmem>>, vector<32x128xf32>
    %cst = arith.constant dense<0.000000e+00> : vector<8x128xf32>
    %2 = tpu.matmul %0, %1, %cst {dimension_numbers = #tpu.dot_dimension_numbers<[1], [0], [0], [1], [0, 0, 1, 1], [], []>} : vector<8x32xf32>, vector<32x128xf32>, vector<8x128xf32> -> vector<8x128xf32>
    %c0_3 = arith.constant 0 : index
    %c0_4 = arith.constant 0 : index
    %3 = vector.load %arg4[%c0_3, %c0_4] : memref<1x128xf32, #tpu.memory_space<vmem>>, vector<1x128xf32>
    %4 = vector.broadcast %3 : vector<1x128xf32> to vector<8x128xf32>
    %5 = arith.addf %2, %4 : vector<8x128xf32>
    %c0_5 = arith.constant 0 : index
    %c0_6 = arith.constant 0 : index
    %6 = vector.load %arg5[%c0_5, %c0_6] : memref<8x128xf32, #tpu.memory_space<vmem>>, vector<8x128xf32>
    tpu.vector_store %arg5[%c0_5, %c0_6], %5 {strides = array<i32>} : memref<8x128xf32, #tpu.memory_space<vmem>>, vector<8x128xf32>,
    return
  }
  func.func @transform_0(%arg0: i32, %arg1: i32) -> (i32, i32) {
    %c0_i32 = arith.constant 0 : i32
    %c0_i32_0 = arith.constant 0 : i32
    return %arg0, %c0_i32 : i32, i32
  }
  func.func @transform_1(%arg0: i32, %arg1: i32) -> (i32, i32) {
    %c0_i32 = arith.constant 0 : i32
    %c0_i32_0 = arith.constant 0 : i32
    return %c0_i32, %arg1 : i32, i32
  }
  func.func @transform_2(%arg0: i32, %arg1: i32) -> (i32, i32) {
    %c0_i32 = arith.constant 0 : i32
    %c0_i32_0 = arith.constant 0 : i32
    return %c0_i32, %arg1 : i32, i32
  }
  func.func @transform_3(%arg0: i32, %arg1: i32) -> (i32, i32) {
    %c0_i32 = arith.constant 0 : i32
    return %arg0, %arg1 : i32, i32
  }
}

</mosaic_0001>

<llo_original>
// kernel: _linear_forward.1
$region0: #{_linear_forward.1}
  #allocation0 [shape = 'u32[]', space=smem, size = 0x4, offset = 0x4, fixed_abs, tag = 'smem constant byte address 0x4 - core index']
  #allocation1 [shape = 'u32[144,128]{1,0:T(1,128)}', space=vmem, size = 0x12000, scoped, tag = 'internal scratch']
  %s0 = inlined_call_operand.hbm [shape: f32[8,32], index: 0, kind: input, shape index: {}]
  %s1 = inlined_call_operand.hbm [shape: f32[32,128], index: 1, kind: input, shape index: {}]
  %s2 = inlined_call_operand.vmem [shape: f32[1,128], index: 2, kind: input, shape index: {}]
  %s3 = inlined_call_operand.vmem [shape: f32[8,128], index: 3, kind: output, shape index: {}]
  %s4 = sld [smem:[#allocation0]]
  $region30: #{_linear_forward.1} parent=0
    _
  %s6 = ssub.s32 1, %s4
  %s7 = scalar_select 0, %s6, %s4
  $region1: #{_linear_forward.1} parent=0
    #allocation2 [shape = 'u8[4096]{0}', space=vmem, size = 0x1000, scoped, tag = 'input window, operand 0, single buffered']
    #allocation3 [shape = 's32[1]{0}', space=sflag, size = 0x4, scoped, tag = 'scoped memory for _linear_forward.1']
    #allocation4 [shape = 'u8[16384]{0}', space=vmem, size = 0x4000, scoped, tag = 'input window, operand 1, single buffered']
    #allocation5 [shape = 's32[1]{0}', space=sflag, size = 0x4, scoped, tag = 'scoped memory for _linear_forward.1']
    %8 = vsyncpa [#allocation3], 0
    %9 = vsyncpa [#allocation5], 0
    // Predicated region
    $region2: #{_linear_forward.1} parent=1 // pred_check
      _
    $region3: #{_linear_forward.1} parent=1 // pred_check_branch
      %11 = sbr.rel (0) target = $region5
    $region4: #{_linear_forward.1} parent=1 // pred_region
      %s13 = ssub.s32 128, 128
      %14 = vsyncadd [#allocation3], %s13
      %s16 = sshll.u32 [#allocation2], 4
      %s17 = int_to_ptr.vmem [resolvable:$true] %s16
      %19 = dma.hbm_to_vmem [thread:$0]  %s0, 128, %s17, [#allocation3]
    $region5: #{_linear_forward.1} parent=1 // pred_fallthru
      _
    // Predicated region
    $region6: #{_linear_forward.1} parent=1 // pred_check
      _
    $region7: #{_linear_forward.1} parent=1 // pred_check_branch
      %21 = sbr.rel (0) target = $region9
    $region8: #{_linear_forward.1} parent=1 // pred_region
      %s23 = ssub.s32 512, 512
      %24 = vsyncadd [#allocation5], %s23
      %s25 = sshll.u32 [#allocation4], 4
      %s26 = int_to_ptr.vmem [resolvable:$true] %s25
      %31 = dma.hbm_to_vmem [thread:$0]  %s1, 512, %s26, [#allocation5], 128, 128, 8
    $region9: #{_linear_forward.1} parent=1 // pred_fallthru
      _
    // Predicated region
    $region10: #{_linear_forward.1} parent=1 // pred_check
      _
    $region11: #{_linear_forward.1} parent=1 // pred_check_branch
      %33 = sbr.rel (0) target = $region13
    $region12: #{_linear_forward.1} parent=1 // pred_region
      _
    $region13: #{_linear_forward.1} parent=1 // pred_fallthru
      _
    // Predicated region
    $region14: #{_linear_forward.1} parent=1 // pred_check
      _
    $region15: #{_linear_forward.1} parent=1 // pred_check_branch
      %35 = sbr.rel (0) target = $region17
    $region16: #{_linear_forward.1} parent=1 // pred_region
      %36 = dma.done [#allocation3], 128
    $region17: #{_linear_forward.1} parent=1 // pred_fallthru
      _
    // Predicated region
    $region18: #{_linear_forward.1} parent=1 // pred_check
      _
    $region19: #{_linear_forward.1} parent=1 // pred_check_branch
      %38 = sbr.rel (0) target = $region21
    $region20: #{_linear_forward.1} parent=1 // pred_region
      %39 = dma.done [#allocation5], 512
    $region21: #{_linear_forward.1} parent=1 // pred_fallthru
      _
    %v40 = vld [vmem:[#allocation2] sm:$0xff]
    %v41 = vld [vmem:[#allocation4] sm:$0xff]
    %v42 = vld [vmem:[#allocation4 + $0x8] sm:$0xff]
    %v43 = vld [vmem:[#allocation4 + $0x10] sm:$0xff]
    %v44 = vld [vmem:[#allocation4 + $0x18] sm:$0xff]
    %v45 = vld [vmem:[%s2] sm:$0x1]
    %v47 = vlaneseq
    %v48 = vshrl.u32 %v47, 7
    %v49 = vsub.s32 0, %v48
    %v50 = vrot.slane %v45, %v49
    %vm52 = vcmask 261120
    %v54 = vsel %vm52, %v40, 0
    %56 = vmatprep.subr.mxu0 0.0
    %57 = vmatpush1.msra.mxu0 %v41
    %58 = vmatprep.subr.mxu0 0.0
    %59 = vmatpush1.msra.mxu0 %v42
    %60 = vmatprep.subr.mxu0 0.0
    %61 = vmatpush1.msra.mxu0 %v43
    %62 = vmatprep.subr.mxu0 0.0
    %63 = vmatpush1.msra.mxu0 %v44
    %64 = vmatprep.subr.mxu0 0.0
    %65 = vmatpush1.msra.mxu0 0.0
    %66 = vmatprep.subr.mxu0 0.0
    %67 = vmatpush1.msra.mxu0 0.0
    %68 = vmatprep.subr.mxu0 0.0
    %69 = vmatpush1.msra.mxu0 0.0
    %70 = vmatprep.subr.mxu0 0.0
    %71 = vmatpush1.msra.mxu0 0.0
    %72 = vmatprep.subr.mxu0 0.0
    %73 = vmatpush1.msra.mxu0 0.0
    %74 = vmatprep.subr.mxu0 0.0
    %75 = vmatpush1.msra.mxu0 0.0
    %76 = vmatprep.subr.mxu0 0.0
    %77 = vmatpush1.msra.mxu0 0.0
    %78 = vmatprep.subr.mxu0 0.0
    %79 = vmatpush1.msra.mxu0 0.0
    %80 = vmatprep.subr.mxu0 0.0
    %81 = vmatpush1.msra.mxu0 0.0
    %82 = vmatprep.subr.mxu0 0.0
    %83 = vmatpush1.msra.mxu0 0.0
    %84 = vmatprep.subr.mxu0 0.0
    %85 = vmatpush1.msra.mxu0 0.0
    %86 = vmatprep.subr.mxu0 0.0
    %87 = vmatpush1.msra.mxu0 0.0
    %88 = vmatprep.subr.mxu0 0.0
    %89 = vmatpush1.msra.mxu0 0.0
    %90 = vmatprep.subr.mxu0 0.0
    %91 = vmatpush1.msra.mxu0 0.0
    %92 = vmatprep.subr.mxu0 0.0
    %93 = vmatpush1.msra.mxu0 0.0
    %94 = vmatprep.subr.mxu0 0.0
    %95 = vmatpush1.msra.mxu0 0.0
    %96 = vmatprep.subr.mxu0 0.0
    %97 = vmatpush1.msra.mxu0 0.0
    %98 = vmatprep.subr.mxu0 0.0
    %99 = vmatpush1.msra.mxu0 0.0
    %100 = vmatprep.subr.mxu0 0.0
    %101 = vmatpush1.msra.mxu0 0.0
    %102 = vmatprep.subr.mxu0 0.0
    %103 = vmatpush1.msra.mxu0 0.0
    %104 = vmatprep.subr.mxu0 0.0
    %105 = vmatpush1.msra.mxu0 0.0
    %106 = vmatprep.subr.mxu0 0.0
    %107 = vmatpush1.msra.mxu0 0.0
    %108 = vmatprep.subr.mxu0 0.0
    %109 = vmatpush1.msra.mxu0 0.0
    %110 = vmatprep.subr.mxu0 0.0
    %111 = vmatpush1.msra.mxu0 0.0
    %112 = vmatprep.subr.mxu0 0.0
    %113 = vmatpush1.msra.mxu0 0.0
    %114 = vmatprep.subr.mxu0 0.0
    %115 = vmatpush1.msra.mxu0 0.0
    %116 = vmatprep.subr.mxu0 0.0
    %117 = vmatpush1.msra.mxu0 0.0
    %118 = vmatprep.subr.mxu0 0.0
    %119 = vmatpush1.msra.mxu0 0.0
    %120 = vmatprep.mubr.f32.mxu0 0.0
    %121 = vmatmul.mubr.f32.gmra.mrb[0].mxu0 %v54
    %v122 = vpop.f32.mrb[0].mxu0
    %v123 = vadd.f32 %v50, %v122
    %v124 = vpop.f32.mrb[0].mxu0
    %125 = vdwg.mxu0
    %126 = vst [vmem:[%s3] sm:$0xff] %v123
    // Predicated region
    $region22: #{_linear_forward.1} parent=1 // pred_check
      _
    $region23: #{_linear_forward.1} parent=1 // pred_check_branch
      %128 = sbr.rel (0) target = $region25
    $region24: #{_linear_forward.1} parent=1 // pred_region
      _
    $region25: #{_linear_forward.1} parent=1 // pred_fallthru
      _
    // Predicated region
    $region26: #{_linear_forward.1} parent=1 // pred_check
      _
    $region27: #{_linear_forward.1} parent=1 // pred_check_branch
      %130 = sbr.rel (0) target = $region29
    $region28: #{_linear_forward.1} parent=1 // pred_region
      _
    $region29: #{_linear_forward.1} parent=1 // pred_fallthru
      _
    %131 = vsyncpa [#allocation3], 1
    %132 = vsyncpa [#allocation5], 1

</llo_original>
